<compile_context>
chip_gen: v7x
topology: tpu7x:2x2x1
jax: 0.10.0
libtpu: 0.0.40
codegen_flags: <defaults>
</compile_context>

<pallas_src>
import math

import jax
import jax.numpy as jnp
from jax.experimental import pallas as pl
from jax.experimental.pallas import tpu as pltpu


LANE = 128


def _round_up(n, m):
    return ((n + m - 1) // m) * m


def dqn_mlp_kernel(x_ref, w_ref, b_ref, o_ref):
    """Fused forward: relu(relu(relu(x@W1+b1)@W2+b2)@W3+b3)@W4+b4.

    x_ref: (tb, D) f32   -- features zero-padded to lane-dense width D
    w_ref: (4, D, D) bf16 -- stacked, pre-transposed [in, out], zero-padded
    b_ref: (4, D) f32     -- packed biases, zero-padded
    o_ref: (tb, D)        -- lane-dense output; only [:, :out_dim] is meaningful

    All matmuls accumulate in f32 on the MXU; bias-add / ReLU stay in f32.
    Zero padding is exact: padded rows/cols of every weight are 0, so padded
    activation lanes stay 0 through all layers and contribute nothing.
    """
    h = x_ref[...].astype(jnp.bfloat16)

    h = jnp.dot(h, w_ref[0], preferred_element_type=jnp.float32)
    h = jnp.maximum(h + b_ref[0:1, :], 0.0).astype(jnp.bfloat16)

    h = jnp.dot(h, w_ref[1], preferred_element_type=jnp.float32)
    h = jnp.maximum(h + b_ref[1:2, :], 0.0).astype(jnp.bfloat16)

    h = jnp.dot(h, w_ref[2], preferred_element_type=jnp.float32)
    h = jnp.maximum(h + b_ref[2:3, :], 0.0).astype(jnp.bfloat16)

    h = jnp.dot(h, w_ref[3], preferred_element_type=jnp.float32)
    o_ref[...] = (h + b_ref[3:4, :]).astype(o_ref.dtype)
    # TODO(synk): optional in-kernel argmax over the first out_dim lanes would
    # collapse the (B, D) output slab to a (B,) action index for DQN inference.


def prepare_params(torch_params):
    """One-time conversion from PyTorch convention (W: [out, in] f32, b: [out]).

    Pre-transposes to [in, out], zero-pads every dim to a common lane-dense
    width D (multiple of 128), casts weights to bf16, and stacks:
      w: (4, D, D) bf16, b: (4, D) f32.
    """
    w1, b1 = torch_params["w1"], torch_params["b1"]
    w2, b2 = torch_params["w2"], torch_params["b2"]
    w3, b3 = torch_params["w3"], torch_params["b3"]
    w4, b4 = torch_params["w4"], torch_params["b4"]

    in_dim = w1.shape[1]
    hidden_dim = w1.shape[0]
    out_dim = w4.shape[0]
    D = max(_round_up(in_dim, LANE), _round_up(hidden_dim, LANE),
            _round_up(out_dim, LANE))

    def _pad_w(w_t):  # w_t: [in, out] -> [D, D]
        return jnp.pad(w_t, ((0, D - w_t.shape[0]), (0, D - w_t.shape[1])))

    def _pad_b(b):
        return jnp.pad(b, (0, D - b.shape[0]))

    w_stack = jnp.stack(
        [_pad_w(w1.T), _pad_w(w2.T), _pad_w(w3.T), _pad_w(w4.T)],
        axis=0).astype(jnp.bfloat16)
    b_stack = jnp.stack(
        [_pad_b(b1), _pad_b(b2), _pad_b(b3), _pad_b(b4)],
        axis=0).astype(jnp.float32)

    return {
        "w": w_stack,
        "b": b_stack,
        "in_dim": in_dim,
        "hidden_dim": hidden_dim,
        "out_dim": out_dim,
        "padded_dim": D,
    }
    # TODO(synk): noisy_network=True path (noisy_linear) adds factored-Gaussian
    # weight/bias noise before the matmul; the default constructor uses
    # nn.Linear, which is what is implemented here.


def _choose_batch_tile(B, batch_tile):
    """Batch tile: large (amortize per-step pipeline overhead), multiple of 8,
    and >= 2 grid programs for big batches so both v7x TensorCores get work."""
    if B <= 8:
        return B                                   # single full-array block
    tb = min(batch_tile, _round_up(pl.cdiv(B, 2), 8))
    return min(tb, _round_up(B, 8))


def vanilla_dqn_forward(x, kparams, *, batch_tile=1024,
                        out_dtype=jnp.bfloat16, slice_output=True):
    """x: [B, input_dim] f32. kparams: output of prepare_params().

    Returns [B, out_dim] (or the padded [B, D] buffer if slice_output=False).
    """
    B, in_dim = x.shape
    assert in_dim == kparams["in_dim"]
    D = kparams["padded_dim"]
    w, b = kparams["w"], kparams["b"]
    hidden_dim, out_dim = kparams["hidden_dim"], kparams["out_dim"]

    # Zero-pad features to the lane-dense width (tiny, one pass over x); lets
    # all four matmuls run on full 128-lane tiles and the weights travel as a
    # single stacked operand.
    x_in = x if in_dim == D else jnp.pad(x, ((0, 0), (0, D - in_dim)))

    tb = _choose_batch_tile(B, batch_tile)
    grid = (pl.cdiv(B, tb),)
    # Note: if B % tb != 0 the last block's x reads are padded and its output
    # rows are clipped to the array bounds by the Pallas pipeline.

    in_specs = [
        pl.BlockSpec((tb, D), lambda i: (i, 0)),
        pl.BlockSpec(w.shape, lambda i: (0, 0, 0)),  # VMEM-resident weights
        pl.BlockSpec(b.shape, lambda i: (0, 0)),     # VMEM-resident biases
    ]
    out_specs = pl.BlockSpec((tb, D), lambda i: (i, 0))

    # Logical (unpadded) flop count; advisory only.
    flops = 2 * B * (in_dim * hidden_dim + 2 * hidden_dim * hidden_dim
                     + hidden_dim * out_dim)
    bytes_accessed = (int(x_in.size) * x_in.dtype.itemsize
                      + int(w.size) * w.dtype.itemsize
                      + int(b.size) * b.dtype.itemsize
                      + B * D * jnp.dtype(out_dtype).itemsize)

    out = pl.pallas_call(
        dqn_mlp_kernel,
        out_shape=jax.ShapeDtypeStruct((B, D), out_dtype),
        grid=grid,
        in_specs=in_specs,
        out_specs=out_specs,
        compiler_params=pltpu.CompilerParams(
            dimension_semantics=("parallel",),
            vmem_limit_bytes=16 * 1024 * 1024),   # working set < 3 MiB
        cost_estimate=pl.CostEstimate(
            flops=flops, bytes_accessed=bytes_accessed, transcendentals=0),
    )(x_in, w, b)

    if slice_output:
        return out[:, :out_dim]
    return out


def init_linear_params(key, in_dim, out_dim):
    """Deterministic init matching nn.Linear's default (uniform +/- 1/sqrt(in))."""
    kw, kb = jax.random.split(key)
    bound = 1.0 / math.sqrt(in_dim)
    w = jax.random.uniform(kw, (out_dim, in_dim), jnp.float32, -bound, bound)
    b = jax.random.uniform(kb, (out_dim,), jnp.float32, -bound, bound)
    return w, b


def reference_forward_f32(x, p):
    """Pure-JAX f32 reference of VanillaDQN.forward (noisy_network=False)."""
    h = jnp.maximum(x @ p["w1"].T + p["b1"], 0.0)
    h = jnp.maximum(h @ p["w2"].T + p["b2"], 0.0)
    h = jnp.maximum(h @ p["w3"].T + p["b3"], 0.0)
    return h @ p["w4"].T + p["b4"]


def reference_forward_bf16(x, p):
    """Mirror of the kernel's numerics (bf16 MXU inputs, f32 accumulate)."""
    def layer(h, w, b, relu):
        y = jnp.dot(h.astype(jnp.bfloat16), w.T.astype(jnp.bfloat16),
                    preferred_element_type=jnp.float32) + b
        return jnp.maximum(y, 0.0) if relu else y
    h = layer(x, p["w1"], p["b1"], True)
    h = layer(h, p["w2"], p["b2"], True)
    h = layer(h, p["w3"], p["b3"], True)
    return layer(h, p["w4"], p["b4"], False)


if __name__ == "__main__":
    # Small shapes consistent with the module: a state-vector DQN.
    batch = 2
    input_dim = 16
    hidden_dim = 32
    output_dim = 8

    key = jax.random.PRNGKey(0)
    k_x, k1, k2, k3, k4, k_big = jax.random.split(key, 6)

    x = jax.random.normal(k_x, (batch, input_dim), jnp.float32)

    w1, b1 = init_linear_params(k1, input_dim, hidden_dim)
    w2, b2 = init_linear_params(k2, hidden_dim, hidden_dim)
    w3, b3 = init_linear_params(k3, hidden_dim, hidden_dim)
    w4, b4 = init_linear_params(k4, hidden_dim, output_dim)
    params = {"w1": w1, "b1": b1, "w2": w2, "b2": b2,
              "w3": w3, "b3": b3, "w4": w4, "b4": b4}

    kparams = prepare_params(params)   # one-time: transpose, pad, bf16, stack

    # --- small batch (spec-consistent) ---
    out = vanilla_dqn_forward(x, kparams)
    out = jax.block_until_ready(out)
    assert out.shape == (batch, output_dim)

    out_f32 = out.astype(jnp.float32)
    ref_bf16 = reference_forward_bf16(x, params)
    ref_f32 = reference_forward_f32(x, params)
    assert jnp.allclose(out_f32, ref_bf16, atol=2e-2, rtol=2e-2), (
        f"bf16-mirror max err {jnp.max(jnp.abs(out_f32 - ref_bf16))}")
    assert jnp.allclose(out_f32, ref_f32, atol=6e-2, rtol=6e-2), (
        f"f32-ref max err {jnp.max(jnp.abs(out_f32 - ref_f32))}")

    # --- larger batch: exercises the multi-program grid (2 programs -> both
    # v7x TensorCores) with exact tiling (256 = 2 * 128) ---
    big_batch = 256
    x_big = jax.random.normal(k_big, (big_batch, input_dim), jnp.float32)
    out_big = vanilla_dqn_forward(x_big, kparams)
    out_big = jax.block_until_ready(out_big)
    assert out_big.shape == (big_batch, output_dim)

    out_big_f32 = out_big.astype(jnp.float32)
    ref_big_bf16 = reference_forward_bf16(x_big, params)
    ref_big_f32 = reference_forward_f32(x_big, params)
    assert jnp.allclose(out_big_f32, ref_big_bf16, atol=2e-2, rtol=2e-2), (
        f"bf16-mirror (big) max err {jnp.max(jnp.abs(out_big_f32 - ref_big_bf16))}")
    assert jnp.allclose(out_big_f32, ref_big_f32, atol=6e-2, rtol=6e-2), (
        f"f32-ref (big) max err {jnp.max(jnp.abs(out_big_f32 - ref_big_f32))}")

    print("KERNEL_OK")
</pallas_src>

<mosaic_0001>
module attributes {stable_mosaic.version = 11 : i64} {
  func.func @dqn_mlp_kernel(%arg0: i32, %arg1: memref<2x128xf32, #tpu.memory_space<vmem>>, %arg2: memref<4x128x128xbf16, #tpu.memory_space<vmem>>, %arg3: memref<4x128xf32, #tpu.memory_space<vmem>>, %arg4: memref<2x128xbf16, #tpu.memory_space<vmem>>) attributes {dimension_semantics = [#tpu.dimension_semantics<parallel>], iteration_bounds = array<i64: 1>, scalar_prefetch = 0 : i64, scratch_operands = 0 : i64, tpu.core_type = #tpu.core_type<tc>, window_params = [{transform_indices = @transform_0, window_bounds = array<i64: 2, 128>}, {pipeline_mode = #tpu.pipeline_mode<synchronous>, transform_indices = @transform_1, window_bounds = array<i64: 4, 128, 128>}, {pipeline_mode = #tpu.pipeline_mode<synchronous>, transform_indices = @transform_2, window_bounds = array<i64: 4, 128>}, {transform_indices = @transform_3, window_bounds = array<i64: 2, 128>}]} {
    %c0 = arith.constant 0 : index
    %c0_0 = arith.constant 0 : index
    %0 = vector.load %arg1[%c0, %c0_0] : memref<2x128xf32, #tpu.memory_space<vmem>>, vector<2x128xf32>
    %1 = arith.truncf %0 : vector<2x128xf32> to vector<2x128xbf16>
    %c0_1 = arith.constant 0 : index
    %c0_2 = arith.constant 0 : index
    %c0_3 = arith.constant 0 : index
    %2 = vector.load %arg2[%c0_1, %c0_2, %c0_3] : memref<4x128x128xbf16, #tpu.memory_space<vmem>>, vector<1x128x128xbf16>
    %3 = vector.shape_cast %2 : vector<1x128x128xbf16> to vector<128x128xbf16>
    %cst = arith.constant dense<0.000000e+00> : vector<2x128xf32>
    %4 = tpu.matmul %1, %3, %cst {dimension_numbers = #tpu.dot_dimension_numbers<[1], [0], [0], [1], [0, 0, 1, 1], [], []>} : vector<2x128xbf16>, vector<128x128xbf16>, vector<2x128xf32> -> vector<2x128xf32>
    %c0_4 = arith.constant 0 : index
    %c0_5 = arith.constant 0 : index
    %5 = vector.load %arg3[%c0_4, %c0_5] : memref<4x128xf32, #tpu.memory_space<vmem>>, vector<1x128xf32>
    %6 = vector.broadcast %5 : vector<1x128xf32> to vector<2x128xf32>
    %7 = arith.addf %4, %6 : vector<2x128xf32>
    %cst_6 = arith.constant 0.000000e+00 : f32
    %8 = vector.broadcast %cst_6 : f32 to vector<2x128xf32>
    %9 = arith.maximumf %7, %8 : vector<2x128xf32>
    %10 = arith.truncf %9 : vector<2x128xf32> to vector<2x128xbf16>
    %c1 = arith.constant 1 : index
    %c0_7 = arith.constant 0 : index
    %c0_8 = arith.constant 0 : index
    %11 = vector.load %arg2[%c1, %c0_7, %c0_8] : memref<4x128x128xbf16, #tpu.memory_space<vmem>>, vector<1x128x128xbf16>
    %12 = vector.shape_cast %11 : vector<1x128x128xbf16> to vector<128x128xbf16>
    %cst_9 = arith.constant dense<0.000000e+00> : vector<2x128xf32>
    %13 = tpu.matmul %10, %12, %cst_9 {dimension_numbers = #tpu.dot_dimension_numbers<[1], [0], [0], [1], [0, 0, 1, 1], [], []>} : vector<2x128xbf16>, vector<128x128xbf16>, vector<2x128xf32> -> vector<2x128xf32>
    %c1_10 = arith.constant 1 : index
    %c0_11 = arith.constant 0 : index
    %14 = vector.load %arg3[%c1_10, %c0_11] : memref<4x128xf32, #tpu.memory_space<vmem>>, vector<1x128xf32>
    %15 = vector.broadcast %14 : vector<1x128xf32> to vector<2x128xf32>
    %16 = arith.addf %13, %15 : vector<2x128xf32>
    %cst_12 = arith.constant 0.000000e+00 : f32
    %17 = vector.broadcast %cst_12 : f32 to vector<2x128xf32>
    %18 = arith.maximumf %16, %17 : vector<2x128xf32>
    %19 = arith.truncf %18 : vector<2x128xf32> to vector<2x128xbf16>
    %c2 = arith.constant 2 : index
    %c0_13 = arith.constant 0 : index
    %c0_14 = arith.constant 0 : index
    %20 = vector.load %arg2[%c2, %c0_13, %c0_14] : memref<4x128x128xbf16, #tpu.memory_space<vmem>>, vector<1x128x128xbf16>
    %21 = vector.shape_cast %20 : vector<1x128x128xbf16> to vector<128x128xbf16>
    %cst_15 = arith.constant dense<0.000000e+00> : vector<2x128xf32>
    %22 = tpu.matmul %19, %21, %cst_15 {dimension_numbers = #tpu.dot_dimension_numbers<[1], [0], [0], [1], [0, 0, 1, 1], [], []>} : vector<2x128xbf16>, vector<128x128xbf16>, vector<2x128xf32> -> vector<2x128xf32>
    %c2_16 = arith.constant 2 : index
    %c0_17 = arith.constant 0 : index
    %23 = vector.load %arg3[%c2_16, %c0_17] : memref<4x128xf32, #tpu.memory_space<vmem>>, vector<1x128xf32>
    %24 = vector.broadcast %23 : vector<1x128xf32> to vector<2x128xf32>
    %25 = arith.addf %22, %24 : vector<2x128xf32>
    %cst_18 = arith.constant 0.000000e+00 : f32
    %26 = vector.broadcast %cst_18 : f32 to vector<2x128xf32>
    %27 = arith.maximumf %25, %26 : vector<2x128xf32>
    %28 = arith.truncf %27 : vector<2x128xf32> to vector<2x128xbf16>
    %c3 = arith.constant 3 : index
    %c0_19 = arith.constant 0 : index
    %c0_20 = arith.constant 0 : index
    %29 = vector.load %arg2[%c3, %c0_19, %c0_20] : memref<4x128x128xbf16, #tpu.memory_space<vmem>>, vector<1x128x128xbf16>
    %30 = vector.shape_cast %29 : vector<1x128x128xbf16> to vector<128x128xbf16>
    %cst_21 = arith.constant dense<0.000000e+00> : vector<2x128xf32>
    %31 = tpu.matmul %28, %30, %cst_21 {dimension_numbers = #tpu.dot_dimension_numbers<[1], [0], [0], [1], [0, 0, 1, 1], [], []>} : vector<2x128xbf16>, vector<128x128xbf16>, vector<2x128xf32> -> vector<2x128xf32>
    %c3_22 = arith.constant 3 : index
    %c0_23 = arith.constant 0 : index
    %32 = vector.load %arg3[%c3_22, %c0_23] : memref<4x128xf32, #tpu.memory_space<vmem>>, vector<1x128xf32>
    %33 = vector.broadcast %32 : vector<1x128xf32> to vector<2x128xf32>
    %34 = arith.addf %31, %33 : vector<2x128xf32>
    %35 = arith.truncf %34 : vector<2x128xf32> to vector<2x128xbf16>
    %c0_24 = arith.constant 0 : index
    %c0_25 = arith.constant 0 : index
    %36 = vector.load %arg4[%c0_24, %c0_25] : memref<2x128xbf16, #tpu.memory_space<vmem>>, vector<2x128xbf16>
    tpu.vector_store %arg4[%c0_24, %c0_25], %35 {strides = array<i32>} : memref<2x128xbf16, #tpu.memory_space<vmem>>, vector<2x128xbf16>,
    return
  }
  func.func @transform_0(%arg0: i32) -> (i32, i32) {
    %c0_i32 = arith.constant 0 : i32
    %c0_i32_0 = arith.constant 0 : i32
    return %arg0, %c0_i32 : i32, i32
  }
  func.func @transform_1(%arg0: i32) -> (i32, i32, i32) {
    %c0_i32 = arith.constant 0 : i32
    %c0_i32_0 = arith.constant 0 : i32
    %c0_i32_1 = arith.constant 0 : i32
    %c0_i32_2 = arith.constant 0 : i32
    return %c0_i32, %c0_i32_0, %c0_i32_1 : i32, i32, i32
  }
  func.func @transform_2(%arg0: i32) -> (i32, i32) {
    %c0_i32 = arith.constant 0 : i32
    %c0_i32_0 = arith.constant 0 : i32
    %c0_i32_1 = arith.constant 0 : i32
    return %c0_i32, %c0_i32_0 : i32, i32
  }
  func.func @transform_3(%arg0: i32) -> (i32, i32) {
    %c0_i32 = arith.constant 0 : i32
    %c0_i32_0 = arith.constant 0 : i32
    return %arg0, %c0_i32 : i32, i32
  }
}

</mosaic_0001>

<llo_original>
// kernel: tpu_custom_call.1
$region0: #{tpu_custom_call.1}
  #allocation0 [shape = 'u32[]', space=smem, size = 0x4, offset = 0x4, fixed_abs, tag = 'smem constant byte address 0x4 - core index']
  #allocation1 [shape = 'u32[144,128]{1,0:T(1,128)}', space=vmem, size = 0x12000, scoped, tag = 'internal scratch']
  %s0 = inlined_call_operand.hbm [shape: f32[2,128], index: 0, kind: input, shape index: {}]
  %s1 = inlined_call_operand.hbm [shape: bf16[4,128,128], index: 1, kind: input, shape index: {}]
  %s2 = inlined_call_operand.vmem [shape: f32[4,128], index: 2, kind: input, shape index: {}]
  %s3 = inlined_call_operand.hbm [shape: bf16[2,128], index: 3, kind: output, shape index: {}]
  %s4 = sld [smem:[#allocation0]]
  $region30: #{tpu_custom_call.1} parent=0
    _
  %s6 = ssub.s32 1, %s4
  %s7 = scalar_select 0, %s6, %s4
  $region1: #{tpu_custom_call.1} parent=0
    #allocation2 [shape = 'u8[1024]{0}', space=vmem, size = 0x400, scoped, tag = 'input window, operand 0, single buffered']
    #allocation3 [shape = 's32[1]{0}', space=sflag, size = 0x4, scoped, tag = 'scoped memory for tpu_custom_call.1']
    #allocation4 [shape = 's32[1]{0}', space=sflag, size = 0x4, scoped, tag = 'scoped memory for tpu_custom_call.1']
    #allocation5 [shape = 'u8[131072]{0}', space=vmem, size = 0x20000, scoped, tag = 'input window, operand 1, single buffered']
    #allocation6 [shape = 's32[1]{0}', space=sflag, size = 0x4, scoped, tag = 'scoped memory for tpu_custom_call.1']
    #allocation7 [shape = 'u8[512]{0}', space=vmem, size = 0x400, scoped, tag = 'output window, operand 0, single buffered']
    %8 = vsyncpa [#allocation3], 0
    %9 = vsyncpa [#allocation6], 0
    %10 = vsyncpa [#allocation4], 0
    // Predicated region
    $region2: #{tpu_custom_call.1} parent=1 // pred_check
      _
    $region3: #{tpu_custom_call.1} parent=1 // pred_check_branch
      %12 = sbr.rel (0) target = $region5
    $region4: #{tpu_custom_call.1} parent=1 // pred_region
      %s14 = ssub.s32 32, 32
      %15 = vsyncadd [#allocation3], %s14
      %s17 = sshll.u32 [#allocation2], 4
      %s18 = int_to_ptr.vmem [resolvable:$true] %s17
      %20 = dma.hbm_to_vmem [thread:$0]  %s0, 32, %s18, [#allocation3]
    $region5: #{tpu_custom_call.1} parent=1 // pred_fallthru
      _
    // Predicated region
    $region6: #{tpu_custom_call.1} parent=1 // pred_check
      _
    $region7: #{tpu_custom_call.1} parent=1 // pred_check_branch
      %22 = sbr.rel (0) target = $region9
    $region8: #{tpu_custom_call.1} parent=1 // pred_region
      %s24 = ssub.s32 4096, 4096
      %25 = vsyncadd [#allocation6], %s24
      %s26 = sshll.u32 [#allocation5], 4
      %s27 = int_to_ptr.vmem [resolvable:$true] %s26
      %32 = dma.hbm_to_vmem [thread:$0]  %s1, 4096, %s27, [#allocation6], 64, 64, 4
    $region9: #{tpu_custom_call.1} parent=1 // pred_fallthru
      _
    // Predicated region
    $region10: #{tpu_custom_call.1} parent=1 // pred_check
      _
    $region11: #{tpu_custom_call.1} parent=1 // pred_check_branch
      %34 = sbr.rel (0) target = $region13
    $region12: #{tpu_custom_call.1} parent=1 // pred_region
      _
    $region13: #{tpu_custom_call.1} parent=1 // pred_fallthru
      _
    // Predicated region
    $region14: #{tpu_custom_call.1} parent=1 // pred_check
      _
    $region15: #{tpu_custom_call.1} parent=1 // pred_check_branch
      %36 = sbr.rel (0) target = $region17
    $region16: #{tpu_custom_call.1} parent=1 // pred_region
      %37 = dma.done [#allocation3], 32
    $region17: #{tpu_custom_call.1} parent=1 // pred_fallthru
      _
    // Predicated region
    $region18: #{tpu_custom_call.1} parent=1 // pred_check
      _
    $region19: #{tpu_custom_call.1} parent=1 // pred_check_branch
      %39 = sbr.rel (0) target = $region21
    $region20: #{tpu_custom_call.1} parent=1 // pred_region
      %40 = dma.done [#allocation6], 4096
    $region21: #{tpu_custom_call.1} parent=1 // pred_fallthru
      _
    %v42 = vld [vmem:[#allocation2] sm:$0x3]
    %v43 = vpack.c.bf16 %v42, %v42
    %v44 = vld [vmem:[#allocation5] sm:$0xf]
    %v45 = vld [vmem:[#allocation5 + $0x4] sm:$0xf]
    %v46 = vld [vmem:[#allocation5 + $0x8] sm:$0xf]
    %v47 = vld [vmem:[#allocation5 + $0xc] sm:$0xf]
    %v48 = vld [vmem:[#allocation5 + $0x10] sm:$0xf]
    %v49 = vld [vmem:[#allocation5 + $0x14] sm:$0xf]
    %v50 = vld [vmem:[#allocation5 + $0x18] sm:$0xf]
    %v51 = vld [vmem:[#allocation5 + $0x1c] sm:$0xf]
    %v52 = vld [vmem:[#allocation5 + $0x20] sm:$0xf]
    %v53 = vld [vmem:[#allocation5 + $0x24] sm:$0xf]
    %v54 = vld [vmem:[#allocation5 + $0x28] sm:$0xf]
    %v55 = vld [vmem:[#allocation5 + $0x2c] sm:$0xf]
    %v56 = vld [vmem:[#allocation5 + $0x30] sm:$0xf]
    %v57 = vld [vmem:[#allocation5 + $0x34] sm:$0xf]
    %v58 = vld [vmem:[#allocation5 + $0x38] sm:$0xf]
    %v59 = vld [vmem:[#allocation5 + $0x3c] sm:$0xf]
    %v60 = vld [vmem:[%s2] sm:$0x1]
    %v61 = vlaneseq
    %v62 = vshrl.u32 %v61, 7
    %v63 = vsub.s32 0, %v62
    %v64 = vrot.slane %v60, %v63
    %v81 = vunpack.c.l.b16 %v44
    %v82 = vunpack.c.l.b16 %v45
    %v83 = vunpack.c.l.b16 %v46
    %v84 = vunpack.c.l.b16 %v47
    %v85 = vunpack.c.l.b16 %v48
    %v86 = vunpack.c.l.b16 %v49
    %v87 = vunpack.c.l.b16 %v50
    %v88 = vunpack.c.l.b16 %v51
    %v89 = vunpack.c.l.b16 %v52
    %v90 = vunpack.c.l.b16 %v53
    %v91 = vunpack.c.l.b16 %v54
    %v92 = vunpack.c.l.b16 %v55
    %v93 = vunpack.c.l.b16 %v56
    %v94 = vunpack.c.l.b16 %v57
    %v95 = vunpack.c.l.b16 %v58
    %v96 = vunpack.c.l.b16 %v59
    %v97 = vpack.c.b16 %v82, %v81
    %v98 = vpack.c.b16 %v84, %v83
    %v99 = vpack.c.b16 %v86, %v85
    %v100 = vpack.c.b16 %v88, %v87
    %v101 = vpack.c.b16 %v90, %v89
    %v102 = vpack.c.b16 %v92, %v91
    %v103 = vpack.c.b16 %v94, %v93
    %v104 = vpack.c.b16 %v96, %v95
    %113 = vmatprep.subr.bf16.mxu0 0
    %114 = vmatpush1.bf16.msra.mxu0 %v97
    %115 = vmatprep.subr.bf16.mxu0 0
    %116 = vmatpush1.bf16.msra.mxu0 %v98
    %117 = vmatprep.subr.bf16.mxu0 0
    %118 = vmatpush1.bf16.msra.mxu0 %v99
    %119 = vmatprep.subr.bf16.mxu0 0
    %120 = vmatpush1.bf16.msra.mxu0 %v100
    %121 = vmatprep.subr.bf16.mxu0 0
    %122 = vmatpush1.bf16.msra.mxu0 %v101
    %123 = vmatprep.subr.bf16.mxu0 0
    %124 = vmatpush1.bf16.msra.mxu0 %v102
    %125 = vmatprep.subr.bf16.mxu0 0
    %126 = vmatpush1.bf16.msra.mxu0 %v103
    %127 = vmatprep.subr.bf16.mxu0 0
    %128 = vmatpush1.bf16.msra.mxu0 %v104
    %129 = vmatprep.subr.bf16.mxu0 0
    %130 = vmatpush1.bf16.msra.mxu0 0
    %131 = vmatprep.subr.bf16.mxu0 0
    %132 = vmatpush1.bf16.msra.mxu0 0
    %133 = vmatprep.subr.bf16.mxu0 0
    %134 = vmatpush1.bf16.msra.mxu0 0
    %135 = vmatprep.subr.bf16.mxu0 0
    %136 = vmatpush1.bf16.msra.mxu0 0
    %137 = vmatprep.subr.bf16.mxu0 0
    %138 = vmatpush1.bf16.msra.mxu0 0
    %139 = vmatprep.subr.bf16.mxu0 0
    %140 = vmatpush1.bf16.msra.mxu0 0
    %141 = vmatprep.subr.bf16.mxu0 0
    %142 = vmatpush1.bf16.msra.mxu0 0
    %143 = vmatprep.subr.bf16.mxu0 0
    %144 = vmatpush1.bf16.msra.mxu0 0
    %145 = vmatprep.mubr.bf16.mxu0 0
    %146 = vmatmul.mubr.bf16.gmra.mrb[0].mxu0 %v43
    %v147 = vpop.f32.mrb[0].mxu0
    %v148 = vadd.f32 %v64, %v147
    %v149 = vpop.f32.mrb[0].mxu0
    %v150 = vpop.f32.mrb[0].mxu0
    %v151 = vpop.f32.mrb[0].mxu0
    %152 = vdwg.mxu0
    %v153 = vmax.f32 %v148, 0.0
    %v154 = vpack.c.bf16 %v153, %v153
    %s155 = scalar_lea.vmem [#allocation5], 64
    %v156 = vld [vmem:[%s155] sm:$0xf]
    %v157 = vld [vmem:[%s155 + $0x4] sm:$0xf]
    %v158 = vld [vmem:[%s155 + $0x8] sm:$0xf]
    %v159 = vld [vmem:[%s155 + $0xc] sm:$0xf]
    %v160 = vld [vmem:[%s155 + $0x10] sm:$0xf]
    %v161 = vld [vmem:[%s155 + $0x14] sm:$0xf]
    %v162 = vld [vmem:[%s155 + $0x18] sm:$0xf]
    %v163 = vld [vmem:[%s155 + $0x1c] sm:$0xf]
    %v164 = vld [vmem:[%s155 + $0x20] sm:$0xf]
    %v165 = vld [vmem:[%s155 + $0x24] sm:$0xf]
    %v166 = vld [vmem:[%s155 + $0x28] sm:$0xf]
    %v167 = vld [vmem:[%s155 + $0x2c] sm:$0xf]
    %v168 = vld [vmem:[%s155 + $0x30] sm:$0xf]
    %v169 = vld [vmem:[%s155 + $0x34] sm:$0xf]
    %v170 = vld [vmem:[%s155 + $0x38] sm:$0xf]
    %v171 = vld [vmem:[%s155 + $0x3c] sm:$0xf]
    %v172 = vld [vmem:[%s2 + $0x1] sm:$0x1]
    %v173 = vlaneseq
    %v174 = vshrl.u32 %v173, 7
    %v175 = vsub.s32 0, %v174
    %v176 = vrot.slane %v172, %v175
    %v193 = vunpack.c.l.b16 %v156
    %v194 = vunpack.c.l.b16 %v157
    %v195 = vunpack.c.l.b16 %v158
    %v196 = vunpack.c.l.b16 %v159
    %v197 = vunpack.c.l.b16 %v160
    %v198 = vunpack.c.l.b16 %v161
    %v199 = vunpack.c.l.b16 %v162
    %v200 = vunpack.c.l.b16 %v163
    %v201 = vunpack.c.l.b16 %v164
    %v202 = vunpack.c.l.b16 %v165
    %v203 = vunpack.c.l.b16 %v166
    %v204 = vunpack.c.l.b16 %v167
    %v205 = vunpack.c.l.b16 %v168
    %v206 = vunpack.c.l.b16 %v169
    %v207 = vunpack.c.l.b16 %v170
    %v208 = vunpack.c.l.b16 %v171
    %v209 = vpack.c.b16 %v194, %v193
    %v210 = vpack.c.b16 %v196, %v195
    %v211 = vpack.c.b16 %v198, %v197
    %v212 = vpack.c.b16 %v200, %v199
    %v213 = vpack.c.b16 %v202, %v201
    %v214 = vpack.c.b16 %v204, %v203
    %v215 = vpack.c.b16 %v206, %v205
    %v216 = vpack.c.b16 %v208, %v207
    %225 = vmatprep.subr.bf16.mxu0 0
    %226 = vmatpush1.bf16.msra.mxu0 %v209
    %227 = vmatprep.subr.bf16.mxu0 0
    %228 = vmatpush1.bf16.msra.mxu0 %v210
    %229 = vmatprep.subr.bf16.mxu0 0
    %230 = vmatpush1.bf16.msra.mxu0 %v211
    %231 = vmatprep.subr.bf16.mxu0 0
    %232 = vmatpush1.bf16.msra.mxu0 %v212
    %233 = vmatprep.subr.bf16.mxu0 0
    %234 = vmatpush1.bf16.msra.mxu0 %v213
    %235 = vmatprep.subr.bf16.mxu0 0
    %236 = vmatpush1.bf16.msra.mxu0 %v214
    %237 = vmatprep.subr.bf16.mxu0 0
    %238 = vmatpush1.bf16.msra.mxu0 %v215
    %239 = vmatprep.subr.bf16.mxu0 0
    %240 = vmatpush1.bf16.msra.mxu0 %v216
    %241 = vmatprep.subr.bf16.mxu0 0
    %242 = vmatpush1.bf16.msra.mxu0 0
    %243 = vmatprep.subr.bf16.mxu0 0
    %244 = vmatpush1.bf16.msra.mxu0 0
    %245 = vmatprep.subr.bf16.mxu0 0
    %246 = vmatpush1.bf16.msra.mxu0 0
    %247 = vmatprep.subr.bf16.mxu0 0
    %248 = vmatpush1.bf16.msra.mxu0 0
    %249 = vmatprep.subr.bf16.mxu0 0
    %250 = vmatpush1.bf16.msra.mxu0 0
    %251 = vmatprep.subr.bf16.mxu0 0
    %252 = vmatpush1.bf16.msra.mxu0 0
    %253 = vmatprep.subr.bf16.mxu0 0
    %254 = vmatpush1.bf16.msra.mxu0 0
    %255 = vmatprep.subr.bf16.mxu0 0
    %256 = vmatpush1.bf16.msra.mxu0 0
    %257 = vmatprep.mubr.bf16.mxu0 0
    %258 = vmatmul.mubr.bf16.gmra.mrb[0].mxu0 %v154
    %v259 = vpop.f32.mrb[0].mxu0
    %v260 = vadd.f32 %v176, %v259
    %v261 = vpop.f32.mrb[0].mxu0
    %v262 = vpop.f32.mrb[0].mxu0
    %v263 = vpop.f32.mrb[0].mxu0
    %264 = vdwg.mxu0
    %v265 = vmax.f32 %v260, 0.0
    %v266 = vpack.c.bf16 %v265, %v265
    %s267 = scalar_lea.vmem [#allocation5], 128
    %v268 = vld [vmem:[%s267] sm:$0xf]
    %v269 = vld [vmem:[%s267 + $0x4] sm:$0xf]
    %v270 = vld [vmem:[%s267 + $0x8] sm:$0xf]
    %v271 = vld [vmem:[%s267 + $0xc] sm:$0xf]
    %v272 = vld [vmem:[%s267 + $0x10] sm:$0xf]
    %v273 = vld [vmem:[%s267 + $0x14] sm:$0xf]
    %v274 = vld [vmem:[%s267 + $0x18] sm:$0xf]
    %v275 = vld [vmem:[%s267 + $0x1c] sm:$0xf]
    %v276 = vld [vmem:[%s267 + $0x20] sm:$0xf]
    %v277 = vld [vmem:[%s267 + $0x24] sm:$0xf]
    %v278 = vld [vmem:[%s267 + $0x28] sm:$0xf]
    %v279 = vld [vmem:[%s267 + $0x2c] sm:$0xf]
    %v280 = vld [vmem:[%s267 + $0x30] sm:$0xf]
    %v281 = vld [vmem:[%s267 + $0x34] sm:$0xf]
    %v282 = vld [vmem:[%s267 + $0x38] sm:$0xf]
    %v283 = vld [vmem:[%s267 + $0x3c] sm:$0xf]
    %v284 = vld [vmem:[%s2 + $0x2] sm:$0x1]
    %v285 = vlaneseq
    %v286 = vshrl.u32 %v285, 7
    %v287 = vsub.s32 0, %v286
    %v288 = vrot.slane %v284, %v287
    %v305 = vunpack.c.l.b16 %v268
    %v306 = vunpack.c.l.b16 %v269
    %v307 = vunpack.c.l.b16 %v270
    %v308 = vunpack.c.l.b16 %v271
    %v309 = vunpack.c.l.b16 %v272
    %v310 = vunpack.c.l.b16 %v273
    %v311 = vunpack.c.l.b16 %v274
    %v312 = vunpack.c.l.b16 %v275
    %v313 = vunpack.c.l.b16 %v276
    %v314 = vunpack.c.l.b16 %v277
    %v315 = vunpack.c.l.b16 %v278
    %v316 = vunpack.c.l.b16 %v279
    %v317 = vunpack.c.l.b16 %v280
    %v318 = vunpack.c.l.b16 %v281
    %v319 = vunpack.c.l.b16 %v282
    %v320 = vunpack.c.l.b16 %v283
    %v321 = vpack.c.b16 %v306, %v305
    %v322 = vpack.c.b16 %v308, %v307
    %v323 = vpack.c.b16 %v310, %v309
    %v324 = vpack.c.b16 %v312, %v311
    %v325 = vpack.c.b16 %v314, %v313
    %v326 = vpack.c.b16 %v316, %v315
    %v327 = vpack.c.b16 %v318, %v317
    %v328 = vpack.c.b16 %v320, %v319
    %337 = vmatprep.subr.bf16.mxu0 0
    %338 = vmatpush1.bf16.msra.mxu0 %v321
    %339 = vmatprep.subr.bf16.mxu0 0
    %340 = vmatpush1.bf16.msra.mxu0 %v322
    %341 = vmatprep.subr.bf16.mxu0 0
    %342 = vmatpush1.bf16.msra.mxu0 %v323
    %343 = vmatprep.subr.bf16.mxu0 0
    %344 = vmatpush1.bf16.msra.mxu0 %v324
    %345 = vmatprep.subr.bf16.mxu0 0
    %346 = vmatpush1.bf16.msra.mxu0 %v325
    %347 = vmatprep.subr.bf16.mxu0 0
    %348 = vmatpush1.bf16.msra.mxu0 %v326
    %349 = vmatprep.subr.bf16.mxu0 0
    %350 = vmatpush1.bf16.msra.mxu0 %v327
    %351 = vmatprep.subr.bf16.mxu0 0
    %352 = vmatpush1.bf16.msra.mxu0 %v328
    %353 = vmatprep.subr.bf16.mxu0 0
    %354 = vmatpush1.bf16.msra.mxu0 0
    %355 = vmatprep.subr.bf16.mxu0 0
    %356 = vmatpush1.bf16.msra.mxu0 0
    %357 = vmatprep.subr.bf16.mxu0 0
    %358 = vmatpush1.bf16.msra.mxu0 0
    %359 = vmatprep.subr.bf16.mxu0 0
    %360 = vmatpush1.bf16.msra.mxu0 0
    %361 = vmatprep.subr.bf16.mxu0 0
    %362 = vmatpush1.bf16.msra.mxu0 0
    %363 = vmatprep.subr.bf16.mxu0 0
    %364 = vmatpush1.bf16.msra.mxu0 0
    %365 = vmatprep.subr.bf16.mxu0 0
    %366 = vmatpush1.bf16.msra.mxu0 0
    %367 = vmatprep.subr.bf16.mxu0 0
    %368 = vmatpush1.bf16.msra.mxu0 0
    %369 = vmatprep.mubr.bf16.mxu0 0
    %370 = vmatmul.mubr.bf16.gmra.mrb[0].mxu0 %v266
    %v371 = vpop.f32.mrb[0].mxu0
    %v372 = vadd.f32 %v288, %v371
    %v373 = vpop.f32.mrb[0].mxu0
    %v374 = vpop.f32.mrb[0].mxu0
    %v375 = vpop.f32.mrb[0].mxu0
    %376 = vdwg.mxu0
    %v377 = vmax.f32 %v372, 0.0
    %v378 = vpack.c.bf16 %v377, %v377
    %s379 = scalar_lea.vmem [#allocation5], 192
    %v380 = vld [vmem:[%s379] sm:$0xf]
    %v381 = vld [vmem:[%s379 + $0x4] sm:$0xf]
    %v382 = vld [vmem:[%s379 + $0x8] sm:$0xf]
    %v383 = vld [vmem:[%s379 + $0xc] sm:$0xf]
    %v384 = vld [vmem:[%s379 + $0x10] sm:$0xf]
    %v385 = vld [vmem:[%s379 + $0x14] sm:$0xf]
    %v386 = vld [vmem:[%s379 + $0x18] sm:$0xf]
    %v387 = vld [vmem:[%s379 + $0x1c] sm:$0xf]
    %v388 = vld [vmem:[%s379 + $0x20] sm:$0xf]
    %v389 = vld [vmem:[%s379 + $0x24] sm:$0xf]
    %v390 = vld [vmem:[%s379 + $0x28] sm:$0xf]
    %v391 = vld [vmem:[%s379 + $0x2c] sm:$0xf]
    %v392 = vld [vmem:[%s379 + $0x30] sm:$0xf]
    %v393 = vld [vmem:[%s379 + $0x34] sm:$0xf]
    %v394 = vld [vmem:[%s379 + $0x38] sm:$0xf]
    %v395 = vld [vmem:[%s379 + $0x3c] sm:$0xf]
    %v396 = vld [vmem:[%s2 + $0x3] sm:$0x1]
    %v397 = vlaneseq
    %v398 = vshrl.u32 %v397, 7
    %v399 = vsub.s32 0, %v398
    %v400 = vrot.slane %v396, %v399
    %v417 = vunpack.c.l.b16 %v380
    %v418 = vunpack.c.l.b16 %v381
    %v419 = vunpack.c.l.b16 %v382
    %v420 = vunpack.c.l.b16 %v383
    %v421 = vunpack.c.l.b16 %v384
    %v422 = vunpack.c.l.b16 %v385
    %v423 = vunpack.c.l.b16 %v386
    %v424 = vunpack.c.l.b16 %v387
    %v425 = vunpack.c.l.b16 %v388
    %v426 = vunpack.c.l.b16 %v389
    %v427 = vunpack.c.l.b16 %v390
    %v428 = vunpack.c.l.b16 %v391
    %v429 = vunpack.c.l.b16 %v392
    %v430 = vunpack.c.l.b16 %v393
    %v431 = vunpack.c.l.b16 %v394
    %v432 = vunpack.c.l.b16 %v395
    %v433 = vpack.c.b16 %v418, %v417
    %v434 = vpack.c.b16 %v420, %v419
    %v435 = vpack.c.b16 %v422, %v421
    %v436 = vpack.c.b16 %v424, %v423
    %v437 = vpack.c.b16 %v426, %v425
    %v438 = vpack.c.b16 %v428, %v427
    %v439 = vpack.c.b16 %v430, %v429
    %v440 = vpack.c.b16 %v432, %v431
    %449 = vmatprep.subr.bf16.mxu0 0
    %450 = vmatpush1.bf16.msra.mxu0 %v433
    %451 = vmatprep.subr.bf16.mxu0 0
    %452 = vmatpush1.bf16.msra.mxu0 %v434
    %453 = vmatprep.subr.bf16.mxu0 0
    %454 = vmatpush1.bf16.msra.mxu0 %v435
    %455 = vmatprep.subr.bf16.mxu0 0
    %456 = vmatpush1.bf16.msra.mxu0 %v436
    %457 = vmatprep.subr.bf16.mxu0 0
    %458 = vmatpush1.bf16.msra.mxu0 %v437
    %459 = vmatprep.subr.bf16.mxu0 0
    %460 = vmatpush1.bf16.msra.mxu0 %v438
    %461 = vmatprep.subr.bf16.mxu0 0
    %462 = vmatpush1.bf16.msra.mxu0 %v439
    %463 = vmatprep.subr.bf16.mxu0 0
    %464 = vmatpush1.bf16.msra.mxu0 %v440
    %465 = vmatprep.subr.bf16.mxu0 0
    %466 = vmatpush1.bf16.msra.mxu0 0
    %467 = vmatprep.subr.bf16.mxu0 0
    %468 = vmatpush1.bf16.msra.mxu0 0
    %469 = vmatprep.subr.bf16.mxu0 0
    %470 = vmatpush1.bf16.msra.mxu0 0
    %471 = vmatprep.subr.bf16.mxu0 0
    %472 = vmatpush1.bf16.msra.mxu0 0
    %473 = vmatprep.subr.bf16.mxu0 0
    %474 = vmatpush1.bf16.msra.mxu0 0
    %475 = vmatprep.subr.bf16.mxu0 0
    %476 = vmatpush1.bf16.msra.mxu0 0
    %477 = vmatprep.subr.bf16.mxu0 0
    %478 = vmatpush1.bf16.msra.mxu0 0
    %479 = vmatprep.subr.bf16.mxu0 0
    %480 = vmatpush1.bf16.msra.mxu0 0
    %481 = vmatprep.mubr.bf16.mxu0 0
    %482 = vmatmul.mubr.bf16.gmra.mrb[0].mxu0 %v378
    %v483 = vpop.f32.mrb[0].mxu0
    %v484 = vadd.f32 %v400, %v483
    %v485 = vpop.f32.mrb[0].mxu0
    %v486 = vpop.f32.mrb[0].mxu0
    %v487 = vpop.f32.mrb[0].mxu0
    %488 = vdwg.mxu0
    %v489 = vpack.c.bf16 %v484, %v484
    %490 = vst [vmem:[#allocation7] sm:$0x1] %v489
    // Predicated region
    $region22: #{tpu_custom_call.1} parent=1 // pred_check
      _
    $region23: #{tpu_custom_call.1} parent=1 // pred_check_branch
      %492 = sbr.rel (0) target = $region25
    $region24: #{tpu_custom_call.1} parent=1 // pred_region
      %s494 = ssub.s32 16, 16
      %495 = vsyncadd [#allocation4], %s494
      %s497 = sshll.u32 [#allocation7], 4
      %s498 = int_to_ptr.vmem [resolvable:$true] %s497
      %500 = dma.vmem_to_hbm [thread:$0]  %s498, 16, %s3, [#allocation4]
    $region25: #{tpu_custom_call.1} parent=1 // pred_fallthru
      _
    // Predicated region
    $region26: #{tpu_custom_call.1} parent=1 // pred_check
      _
    $region27: #{tpu_custom_call.1} parent=1 // pred_check_branch
      %502 = sbr.rel (0) target = $region29
    $region28: #{tpu_custom_call.1} parent=1 // pred_region
      %503 = dma.done [#allocation4], 16
    $region29: #{tpu_custom_call.1} parent=1 // pred_fallthru
      _
    %504 = vsyncpa [#allocation3], 1
    %505 = vsyncpa [#allocation6], 1
    %506 = vsyncpa [#allocation4], 1

</llo_original>
